<compile_context>
chip_gen: v7x
topology: tpu7x:2x2x1
jax: 0.10.0
libtpu: 0.0.40
codegen_flags: <defaults>
</compile_context>

<pallas_src>
import functools

import jax
import jax.numpy as jnp
from jax.experimental import pallas as pl
from jax.experimental.pallas import tpu as pltpu


def _kd_kl_rows_kernel(inv_t_ref, y_pred_ref, y_ref, kl_ref, *, batch):
    """Per-row KL(q || p) for one (TILE_B, C) block of student/teacher logits."""
    tile_rows = y_pred_ref.shape[0]
    inv_t = inv_t_ref[0]                                      # SMEM scalar: 1/T
    yp = y_pred_ref[...].astype(jnp.float32) * inv_t          # (TB, C) student
    yt = y_ref[...].astype(jnp.float32) * inv_t               # (TB, C) teacher

    # Student: only the log-partition is needed.
    a = yp - jnp.max(yp, axis=1, keepdims=True)               # (TB, C)
    log_z_p = jnp.log(jnp.sum(jnp.exp(a), axis=1, keepdims=True))   # (TB, 1)

    # Teacher: exponentials + partition.
    b = yt - jnp.max(yt, axis=1, keepdims=True)                # (TB, C)
    e_t = jnp.exp(b)                                           # (TB, C)
    z_t = jnp.sum(e_t, axis=1, keepdims=True)                  # (TB, 1)

    # kl_row = (1/z_t) * sum_c e_t*(b - a) + (log_z_p - log_z_t); sum_c q == 1.
    cross = jnp.sum(e_t * (b - a), axis=1, keepdims=True)      # (TB, 1)
    kl = pl.reciprocal(z_t) * cross + (log_z_p - jnp.log(z_t)) # (TB, 1)

    # Trailing partial block: rows past the true batch hold unspecified padding
    # data.  Their output rows are dropped by Pallas, but zero them defensively
    # so no NaN/Inf ever reaches the output buffer.
    row_idx = (pl.program_id(0) * tile_rows
               + jax.lax.broadcasted_iota(jnp.int32, (tile_rows, 1), 0))
    kl_ref[...] = jnp.where(row_idx < batch, kl, 0.0)


def _round_up(x, m):
    return ((x + m - 1) // m) * m


def _choose_tile_b(batch, num_classes, itemsize, vmem_budget_bytes):
    """Largest batch tile that keeps double-buffered inputs + temps in budget."""
    sub = max(8, 32 // max(1, itemsize))          # sublane packing (16 for bf16)
    # 2 inputs x 2 pipeline buffers in native dtype + ~6 f32 full-tile temps.
    per_row = 2 * 2 * num_classes * itemsize + 6 * num_classes * 4
    tile = max(sub, vmem_budget_bytes // max(1, per_row))
    tile = min(tile, 512)                          # diminishing returns past ~512
    tile = max(sub, (tile // sub) * sub)
    if tile >= batch:
        tile = _round_up(batch, sub)
    return tile


def temperature_scaled_kl_div_loss(y_pred, y, temperature, *, tile_b=None):
    """Pallas TPU implementation of TemperatureScaledKLDivLoss.forward."""
    assert y_pred.shape == y.shape and y_pred.ndim == 2
    assert y_pred.dtype == y.dtype
    batch, num_classes = y_pred.shape
    itemsize = jnp.dtype(y_pred.dtype).itemsize

    if tile_b is None:
        # 16 MiB tile budget fits every generation's default scoped VMEM.
        tile_b = _choose_tile_b(batch, num_classes, itemsize, 16 * 1024 * 1024)
    num_tiles = pl.cdiv(batch, tile_b)

    inv_t = jnp.reshape(1.0 / jnp.asarray(temperature, jnp.float32), (1,))

    kernel = functools.partial(_kd_kl_rows_kernel, batch=batch)
    row_kl = pl.pallas_call(
        kernel,
        out_shape=jax.ShapeDtypeStruct((batch, 1), jnp.float32),
        grid_spec=pltpu.PrefetchScalarGridSpec(
            num_scalar_prefetch=0,
            grid=(num_tiles,),
            in_specs=[
                pl.BlockSpec(memory_space=pltpu.MemorySpace.SMEM),      # 1/T
                pl.BlockSpec((tile_b, num_classes), lambda i: (i, 0)),  # student
                pl.BlockSpec((tile_b, num_classes), lambda i: (i, 0)),  # teacher
            ],
            out_specs=pl.BlockSpec((tile_b, 1), lambda i: (i, 0)),
        ),
        compiler_params=pltpu.CompilerParams(
            dimension_semantics=("parallel",),
            vmem_limit_bytes=32 * 1024 * 1024,
        ),
        cost_estimate=pl.CostEstimate(
            flops=12 * batch * num_classes,
            transcendentals=2 * batch * num_classes,
            bytes_accessed=2 * batch * num_classes * itemsize + batch * 4,
        ),
    )(inv_t, y_pred, y)

    t = jnp.asarray(temperature, jnp.float32)
    return (t * t / batch) * jnp.sum(row_kl)


if __name__ == "__main__":
    key = jax.random.PRNGKey(0)
    k1, k2 = jax.random.split(key)
    B, C = 20, 128            # B=20 exercises the partial trailing block path
    temperature = 4.0

    y_pred = jax.random.normal(k1, (B, C), dtype=jnp.float32) * 3.0  # student
    y = jax.random.normal(k2, (B, C), dtype=jnp.float32) * 3.0       # teacher

    # Multi-tile path: tile_b=8 -> grid=(3,) with "parallel" batch axis and a
    # partial last block (rows 16..23, only 16..19 valid).
    loss_tiled = temperature_scaled_kl_div_loss(y_pred, y, temperature, tile_b=8)
    loss_tiled = jax.block_until_ready(loss_tiled)

    # Auto tile-size path (single partial block at this small shape).
    loss_auto = temperature_scaled_kl_div_loss(y_pred, y, temperature)
    loss_auto = jax.block_until_ready(loss_auto)

    # Pure-JAX reference (log_softmax for log q avoids 0*(-inf) in the ref).
    log_p_ref = jax.nn.log_softmax(y_pred / temperature, axis=1)
    log_q_ref = jax.nn.log_softmax(y / temperature, axis=1)
    q_ref = jnp.exp(log_q_ref)
    ref = (temperature ** 2) * jnp.sum(q_ref * (log_q_ref - log_p_ref)) / B

    assert jnp.allclose(loss_tiled, ref, rtol=2e-5, atol=1e-5), (loss_tiled, ref)
    assert jnp.allclose(loss_auto, ref, rtol=2e-5, atol=1e-5), (loss_auto, ref)
    print("KERNEL_OK")
</pallas_src>

<mosaic_0001>
module attributes {stable_mosaic.version = 11 : i64} {
  func.func @_kd_kl_rows_kernel(%arg0: i32, %arg1: memref<1xf32, #tpu.memory_space<smem>>, %arg2: memref<8x128xf32, #tpu.memory_space<vmem>>, %arg3: memref<8x128xf32, #tpu.memory_space<vmem>>, %arg4: memref<8x1xf32, #tpu.memory_space<vmem>>) attributes {dimension_semantics = [#tpu.dimension_semantics<parallel>], iteration_bounds = array<i64: 3>, scalar_prefetch = 0 : i64, scratch_operands = 0 : i64, tpu.core_type = #tpu.core_type<tc>, window_params = [{transform_indices = @transform_0, window_bounds = array<i64: 1>}, {transform_indices = @transform_1, window_bounds = array<i64: 8, 128>}, {transform_indices = @transform_2, window_bounds = array<i64: 8, 128>}, {transform_indices = @transform_3, window_bounds = array<i64: 8, 1>}]} {
    %c0 = arith.constant 0 : index
    %0 = memref.load %arg1[%c0] : memref<1xf32, #tpu.memory_space<smem>>
    %c0_0 = arith.constant 0 : index
    %c0_1 = arith.constant 0 : index
    %1 = vector.load %arg2[%c0_0, %c0_1] : memref<8x128xf32, #tpu.memory_space<vmem>>, vector<8x128xf32>
    %2 = vector.broadcast %0 : f32 to vector<8x128xf32>
    %3 = arith.mulf %1, %2 : vector<8x128xf32>
    %c0_2 = arith.constant 0 : index
    %c0_3 = arith.constant 0 : index
    %4 = vector.load %arg3[%c0_2, %c0_3] : memref<8x128xf32, #tpu.memory_space<vmem>>, vector<8x128xf32>
    %5 = vector.broadcast %0 : f32 to vector<8x128xf32>
    %6 = arith.mulf %4, %5 : vector<8x128xf32>
    %cst = arith.constant dense<0xFF800000> : vector<8xf32>
    %7 = vector.multi_reduction <maximumf>, %3, %cst [1] : vector<8x128xf32> to vector<8xf32>
    %8 = vector.shape_cast %7 : vector<8xf32> to vector<8x1xf32>
    %9 = vector.broadcast %8 : vector<8x1xf32> to vector<8x128xf32>
    %10 = arith.subf %3, %9 : vector<8x128xf32>
    %11 = math.exp %10 : vector<8x128xf32>
    %cst_4 = arith.constant dense<0.000000e+00> : vector<8xf32>
    %12 = vector.multi_reduction <add>, %11, %cst_4 [1] : vector<8x128xf32> to vector<8xf32>
    %13 = vector.shape_cast %12 : vector<8xf32> to vector<8x1xf32>
    %14 = math.log %13 : vector<8x1xf32>
    %cst_5 = arith.constant dense<0xFF800000> : vector<8xf32>
    %15 = vector.multi_reduction <maximumf>, %6, %cst_5 [1] : vector<8x128xf32> to vector<8xf32>
    %16 = vector.shape_cast %15 : vector<8xf32> to vector<8x1xf32>
    %17 = vector.broadcast %16 : vector<8x1xf32> to vector<8x128xf32>
    %18 = arith.subf %6, %17 : vector<8x128xf32>
    %19 = math.exp %18 : vector<8x128xf32>
    %cst_6 = arith.constant dense<0.000000e+00> : vector<8xf32>
    %20 = vector.multi_reduction <add>, %19, %cst_6 [1] : vector<8x128xf32> to vector<8xf32>
    %21 = vector.shape_cast %20 : vector<8xf32> to vector<8x1xf32>
    %22 = arith.subf %18, %10 : vector<8x128xf32>
    %23 = arith.mulf %19, %22 : vector<8x128xf32>
    %cst_7 = arith.constant dense<0.000000e+00> : vector<8xf32>
    %24 = vector.multi_reduction <add>, %23, %cst_7 [1] : vector<8x128xf32> to vector<8xf32>
    %25 = vector.shape_cast %24 : vector<8xf32> to vector<8x1xf32>
    %26 = tpu.reciprocal %21 : vector<8x1xf32> -> vector<8x1xf32>
    %27 = arith.mulf %26, %25 : vector<8x1xf32>
    %28 = math.log %21 : vector<8x1xf32>
    %29 = arith.subf %14, %28 : vector<8x1xf32>
    %30 = arith.addf %27, %29 : vector<8x1xf32>
    %c8_i32 = arith.constant 8 : i32
    %31 = arith.muli %arg0, %c8_i32 : i32
    %32 = tpu.iota {dimensions = array<i32: 0>} : vector<8x1xi32>
    %33 = vector.broadcast %31 : i32 to vector<8x1xi32>
    %34 = arith.addi %33, %32 : vector<8x1xi32>
    %c20_i32 = arith.constant 20 : i32
    %35 = vector.broadcast %c20_i32 : i32 to vector<8x1xi32>
    %36 = arith.cmpi slt, %34, %35 : vector<8x1xi32>
    %cst_8 = arith.constant 0.000000e+00 : f32
    %37 = vector.broadcast %cst_8 : f32 to vector<8x1xf32>
    %38 = arith.select %36, %30, %37 : vector<8x1xi1>, vector<8x1xf32>
    %c0_9 = arith.constant 0 : index
    %c0_10 = arith.constant 0 : index
    %39 = vector.load %arg4[%c0_9, %c0_10] : memref<8x1xf32, #tpu.memory_space<vmem>>, vector<8x1xf32>
    tpu.vector_store %arg4[%c0_9, %c0_10], %38 {strides = array<i32>} : memref<8x1xf32, #tpu.memory_space<vmem>>, vector<8x1xf32>,
    return
  }
  func.func @transform_0(%arg0: i32) -> i32 {
    %c0_i32 = arith.constant 0 : i32
    %c0_i32_0 = arith.constant 0 : i32
    return %c0_i32 : i32
  }
  func.func @transform_1(%arg0: i32) -> (i32, i32) {
    %c0_i32 = arith.constant 0 : i32
    %c0_i32_0 = arith.constant 0 : i32
    return %arg0, %c0_i32 : i32, i32
  }
  func.func @transform_2(%arg0: i32) -> (i32, i32) {
    %c0_i32 = arith.constant 0 : i32
    %c0_i32_0 = arith.constant 0 : i32
    return %arg0, %c0_i32 : i32, i32
  }
  func.func @transform_3(%arg0: i32) -> (i32, i32) {
    %c0_i32 = arith.constant 0 : i32
    %c0_i32_0 = arith.constant 0 : i32
    return %arg0, %c0_i32 : i32, i32
  }
}

</mosaic_0001>

<llo_original>
// kernel: tpu_custom_call.1
$region0: #{tpu_custom_call.1}
  #allocation0 [shape = 'u32[]', space=smem, size = 0x4, offset = 0x4, fixed_abs, tag = 'smem constant byte address 0x4 - core index']
  #allocation1 [shape = 'u32[144,128]{1,0:T(1,128)}', space=vmem, size = 0x12000, scoped, tag = 'internal scratch']
  #allocation2 [shape = 'f32[1]{0:T(128)S(6)}', space=smem, size = 0x200, scoped, tag = 'scoped memory for tpu_custom_call.1']
  %s0 = inlined_call_operand.<no memory space> [shape: f32[1], index: 0, kind: input, shape index: {}]
  %s1 = inlined_call_operand.hbm [shape: f32[20,128], index: 1, kind: input, shape index: {}]
  %s2 = inlined_call_operand.hbm [shape: f32[20,128], index: 2, kind: input, shape index: {}]
  %s3 = inlined_call_operand.vmem [shape: f32[20,1], index: 3, kind: output, shape index: {}]
  %s4 = sld [smem:[#allocation0]]
  $region53: #{tpu_custom_call.1} parent=0
    _
  %s6 = ssub.s32 1, %s4
  %s7 = scalar_select 0, %s6, %s4
  %8 = sst [smem:[#allocation2]] %s0
  $region1: #{tpu_custom_call.1} parent=0
    #allocation3 [shape = 'u8[8192]{0}', space=vmem, size = 0x2000, scoped, tag = 'input window, operand 1']
    #allocation4 [shape = 's32[2]{0}', space=sflag, size = 0x8, scoped, tag = 'scoped memory for tpu_custom_call.1']
    #allocation5 [shape = 'u8[8192]{0}', space=vmem, size = 0x2000, scoped, tag = 'input window, operand 2']
    #allocation6 [shape = 's32[2]{0}', space=sflag, size = 0x8, scoped, tag = 'scoped memory for tpu_custom_call.1']
    %9 = vsyncpa [#allocation4], 0
    %s10 = scalar_lea.sflag [#allocation4], 1
    %11 = vsyncpa %s10, 0
    %12 = vsyncpa [#allocation6], 0
    %s13 = scalar_lea.sflag [#allocation6], 1
    %14 = vsyncpa %s13, 0
    loop: start=0, step=1, limit=5
    $region2: #{tpu_custom_call.1} parent=1 // loop_pre_header
      _
    $region3: #{tpu_custom_call.1} parent=1 // loop_header
      %s16 = sphi 0, %s20
      %p17 = scmp.ge.s32.totalorder %s16, 5
      %s24 = sphi 0, %s24
      %s26 = sphi 0, %s24
      %s27 = sphi 0, %s26
      %s41 = sphi 0, %s27
      %s47 = sphi 0, %s49
      %s50 = sphi 0, %s47
      %s51 = sphi 0, %s50
      %s67 = sphi 0, %s51
      %s73 = sphi 0, %s75
      %s76 = sphi 0, %s73
      %s77 = sphi 0, %s76
      %s93 = sphi 0, %s77
      %s99 = sphi 0, %s101
      %s102 = sphi 0, %s99
      %s103 = sphi 0, %s102
      %s119 = sphi 0, %s103
    $region4: #{tpu_custom_call.1} parent=1 // loop_header_branch
      %19 = sbr.rel (%p17) target = $region8
    $region5: #{tpu_custom_call.1} parent=1 // loop_body
      %s21 = ssub.s32 %s16, 1
      %s22 = ssub.s32 %s16, 2
      %s23 = sadd.s32 %s16, 1
      %s25 = sadd.s32 %s24, 1
      %p28 = scmp.eq.s32.totalorder %s16, 2
      %p29 = scmp.ne.s32.totalorder %s24, %s26
      %p30 = scmp.eq.s32.totalorder %s16, 0
      %p31 = por %p29, %p30
      %p32 = scmp.ne.s32.totalorder %s24, %s26
      %p33 = scmp.eq.s32.totalorder %s21, 2
      %p34 = por %p32, %p33
      %p35 = scmp.ne.s32.totalorder %s26, %s27
      %p36 = scmp.eq.s32.totalorder %s21, 0
      %p37 = por %p35, %p36
      %p38 = scmp.ne.s32.totalorder %s26, %s27
      %p39 = scmp.eq.s32.totalorder %s22, 2
      %p40 = por %p38, %p39
      %p42 = scmp.ne.s32.totalorder %s27, %s41
      %p43 = scmp.eq.s32.totalorder %s22, 0
      %p44 = por %p42, %p43
      %s45 = ssub.s32 %s16, %s23
      %p46 = scmp.eq.s32.totalorder %s45, 0
      %s48 = sadd.s32 %s47, 1
      %s49 = scalar_select %p46, %s47, %s48
      %p52 = pneg %p46
      %p53 = scmp.eq.s32.totalorder %s16, 2
      %p54 = por %p52, %p53
      %p55 = scmp.ne.s32.totalorder %s47, %s50
      %p56 = scmp.eq.s32.totalorder %s16, 0
      %p57 = por %p55, %p56
      %p58 = scmp.ne.s32.totalorder %s47, %s50
      %p59 = scmp.eq.s32.totalorder %s21, 2
      %p60 = por %p58, %p59
      %p61 = scmp.ne.s32.totalorder %s50, %s51
      %p62 = scmp.eq.s32.totalorder %s21, 0
      %p63 = por %p61, %p62
      %p64 = scmp.ne.s32.totalorder %s50, %s51
      %p65 = scmp.eq.s32.totalorder %s22, 2
      %p66 = por %p64, %p65
      %p68 = scmp.ne.s32.totalorder %s51, %s67
      %p69 = scmp.eq.s32.totalorder %s22, 0
      %p70 = por %p68, %p69
      %s71 = ssub.s32 %s16, %s23
      %p72 = scmp.eq.s32.totalorder %s71, 0
      %s74 = sadd.s32 %s73, 1
      %s75 = scalar_select %p72, %s73, %s74
      %p78 = pneg %p72
      %p79 = scmp.eq.s32.totalorder %s16, 2
      %p80 = por %p78, %p79
      %p81 = scmp.ne.s32.totalorder %s73, %s76
      %p82 = scmp.eq.s32.totalorder %s16, 0
      %p83 = por %p81, %p82
      %p84 = scmp.ne.s32.totalorder %s73, %s76
      %p85 = scmp.eq.s32.totalorder %s21, 2
      %p86 = por %p84, %p85
      %p87 = scmp.ne.s32.totalorder %s76, %s77
      %p88 = scmp.eq.s32.totalorder %s21, 0
      %p89 = por %p87, %p88
      %p90 = scmp.ne.s32.totalorder %s76, %s77
      %p91 = scmp.eq.s32.totalorder %s22, 2
      %p92 = por %p90, %p91
      %p94 = scmp.ne.s32.totalorder %s77, %s93
      %p95 = scmp.eq.s32.totalorder %s22, 0
      %p96 = por %p94, %p95
      %s97 = ssub.s32 %s16, %s23
      %p98 = scmp.eq.s32.totalorder %s97, 0
      %s100 = sadd.s32 %s99, 1
      %s101 = scalar_select %p98, %s99, %s100
      %p104 = pneg %p98
      %p105 = scmp.eq.s32.totalorder %s16, 2
      %p106 = por %p104, %p105
      %p107 = scmp.ne.s32.totalorder %s99, %s102
      %p108 = scmp.eq.s32.totalorder %s16, 0
      %p109 = por %p107, %p108
      %p110 = scmp.ne.s32.totalorder %s99, %s102
      %p111 = scmp.eq.s32.totalorder %s21, 2
      %p112 = por %p110, %p111
      %p113 = scmp.ne.s32.totalorder %s102, %s103
      %p114 = scmp.eq.s32.totalorder %s21, 0
      %p115 = por %p113, %p114
      %p116 = scmp.ne.s32.totalorder %s102, %s103
      %p117 = scmp.eq.s32.totalorder %s22, 2
      %p118 = por %p116, %p117
      %p120 = scmp.ne.s32.totalorder %s103, %s119
      %p121 = scmp.eq.s32.totalorder %s22, 0
      %p122 = por %p120, %p121
      %p123 = scmp.le.s32.totalorder 1, %s16
      %p124 = scmp.lt.s32.totalorder %s16, 4
      %p125 = pnand %p123, %p124
      %p126 = pneg %p125
      // Predicated region
      $region9: #{tpu_custom_call.1} parent=5 // pred_check
        _
      $region10: #{tpu_custom_call.1} parent=5 // pred_check_branch
        %128 = sbr.rel (%p125) target = $region12
      $region11: #{tpu_custom_call.1} parent=5 // pred_region
        %s129 = ssub.s32 %s16, 1
        // Predicated region
        $region13: #{tpu_custom_call.1} parent=11 // pred_check
          %p130 = pneg %p37
        $region14: #{tpu_custom_call.1} parent=11 // pred_check_branch
          %132 = sbr.rel (%p130) target = $region16
        $region15: #{tpu_custom_call.1} parent=11 // pred_region
          _
        $region16: #{tpu_custom_call.1} parent=11 // pred_fallthru
          _
      $region12: #{tpu_custom_call.1} parent=5 // pred_fallthru
        _
      %p133 = scmp.lt.s32.totalorder %s16, 3
      // Predicated region
      $region17: #{tpu_custom_call.1} parent=5 // pred_check
        %p134 = pneg %p133
      $region18: #{tpu_custom_call.1} parent=5 // pred_check_branch
        %136 = sbr.rel (%p134) target = $region20
      $region19: #{tpu_custom_call.1} parent=5 // pred_region
        // Predicated region
        $region21: #{tpu_custom_call.1} parent=19 // pred_check
          %p137 = pneg %p57
        $region22: #{tpu_custom_call.1} parent=19 // pred_check_branch
          %139 = sbr.rel (%p137) target = $region24
        $region23: #{tpu_custom_call.1} parent=19 // pred_region
          %s140 = sand.u32 %s47, 1
          %s141 = scalar_lea.sflag [#allocation4], %s140
          %s142 = sand.u32 %s47, 1
          %s143 = smul.addr %s142, 8
          %s144 = scalar_lea.vmem [#allocation3], %s143
          %s146 = ssub.s32 128, 128
          %147 = vsyncadd %s141, %s146
          %s148 = smul.addr %s16, 128
          %s149 = scalar_lea.hbm %s1, %s148
          %s151 = sshll.u32 %s144, 4
          %s152 = int_to_ptr.vmem [resolvable:$true] %s151
          %154 = dma.hbm_to_vmem [thread:$0]  %s149, 128, %s152, %s141
        $region24: #{tpu_custom_call.1} parent=19 // pred_fallthru
          _
        // Predicated region
        $region25: #{tpu_custom_call.1} parent=19 // pred_check
          %p155 = pneg %p83
        $region26: #{tpu_custom_call.1} parent=19 // pred_check_branch
          %157 = sbr.rel (%p155) target = $region28
        $region27: #{tpu_custom_call.1} parent=19 // pred_region
          %s158 = sand.u32 %s73, 1
          %s159 = scalar_lea.sflag [#allocation6], %s158
          %s160 = sand.u32 %s73, 1
          %s161 = smul.addr %s160, 8
          %s162 = scalar_lea.vmem [#allocation5], %s161
          %s164 = ssub.s32 128, 128
          %165 = vsyncadd %s159, %s164
          %s166 = smul.addr %s16, 128
          %s167 = scalar_lea.hbm %s2, %s166
          %s169 = sshll.u32 %s162, 4
          %s170 = int_to_ptr.vmem [resolvable:$true] %s169
          %172 = dma.hbm_to_vmem [thread:$0]  %s167, 128, %s170, %s159
        $region28: #{tpu_custom_call.1} parent=19 // pred_fallthru
          _
      $region20: #{tpu_custom_call.1} parent=5 // pred_fallthru
        _
      %p173 = scmp.le.s32.totalorder 1, %s16
      %p174 = scmp.lt.s32.totalorder %s16, 4
      %p175 = pnand %p173, %p174
      %p176 = pneg %p175
      // Predicated region
      $region29: #{tpu_custom_call.1} parent=5 // pred_check
        _
      $region30: #{tpu_custom_call.1} parent=5 // pred_check_branch
        %178 = sbr.rel (%p175) target = $region32
      $region31: #{tpu_custom_call.1} parent=5 // pred_region
        %s179 = ssub.s32 %s16, 1
        %s180 = sand.u32 %s50, 1
        %s181 = scalar_lea.sflag [#allocation4], %s180
        %s182 = sand.u32 %s50, 1
        %s183 = smul.addr %s182, 8
        %s184 = scalar_lea.vmem [#allocation3], %s183
        // Predicated region
        $region33: #{tpu_custom_call.1} parent=31 // pred_check
          %p185 = pneg %p63
        $region34: #{tpu_custom_call.1} parent=31 // pred_check_branch
          %187 = sbr.rel (%p185) target = $region36
        $region35: #{tpu_custom_call.1} parent=31 // pred_region
          %188 = dma.done %s181, 128
        $region36: #{tpu_custom_call.1} parent=31 // pred_fallthru
          _
        %s189 = sand.u32 %s76, 1
        %s190 = scalar_lea.sflag [#allocation6], %s189
        %s191 = sand.u32 %s76, 1
        %s192 = smul.addr %s191, 8
        %s193 = scalar_lea.vmem [#allocation5], %s192
        // Predicated region
        $region37: #{tpu_custom_call.1} parent=31 // pred_check
          %p194 = pneg %p89
        $region38: #{tpu_custom_call.1} parent=31 // pred_check_branch
          %196 = sbr.rel (%p194) target = $region40
        $region39: #{tpu_custom_call.1} parent=31 // pred_region
          %197 = dma.done %s190, 128
        $region40: #{tpu_custom_call.1} parent=31 // pred_fallthru
          _
        %p198 = pneg %p37
        %p199 = pneg %p34
        %s200 = sand.u32 %s50, 1
        %s201 = scalar_lea.sflag [#allocation4], %s200
        %s202 = sand.u32 %s50, 1
        %s203 = smul.addr %s202, 8
        %s204 = scalar_lea.vmem [#allocation3], %s203
        %p205 = pneg %p63
        %p206 = pneg %p60
        %s207 = sand.u32 %s76, 1
        %s208 = scalar_lea.sflag [#allocation6], %s207
        %s209 = sand.u32 %s76, 1
        %s210 = smul.addr %s209, 8
        %s211 = scalar_lea.vmem [#allocation5], %s210
        %p212 = pneg %p89
        %p213 = pneg %p86
        %p214 = pneg %p115
        %p215 = pneg %p112
        %p216 = scmp.lt.s32.totalorder %s21, 2
        %s217 = scalar_select %p216, %s21, 2
        %s218 = smul.addr %s217, 8
        %s219 = scalar_lea.vmem %s3, %s218
        %p220 = scmp.lt.s32.totalorder %s21, 2
        %s221 = scalar_select %p220, %s21, 2
        %s222 = smul.addr %s221, 8
        %s223 = scalar_lea.vmem %s3, %s222
        %s224 = sld [smem:[#allocation2]]
        %v225 = vld [vmem:[%s184] sm:$0xff]
        %v226 = vstv %s224
        %v227 = vmul.f32 %v225, %v226
        %v228 = vld [vmem:[%s193] sm:$0xff]
        %v229 = vmul.f32 %v228, %v226
        %230 = vmax.xlane.f32.xlu0 %v227
        %v231 = vpop.xlane.xlu0 %230
        %v232 = vsub.f32 %v227, %v231
        %v233 = vmul.f32 %v232, 1.442695
        %v234 = vpow.pop %v233
        %235 = vadd.xlane.f32.xlu0 %v234
        %v236 = vpop.xlane.xlu0 %235
        %v237 = vlog2.pop %v236
        %v238 = vmul.f32 %v237, 0.6931472
        %239 = vmax.xlane.f32.xlu0 %v229
        %v240 = vpop.xlane.xlu0 %239
        %v241 = vsub.f32 %v229, %v240
        %v242 = vmul.f32 %v241, 1.442695
        %v243 = vpow.pop %v242
        %244 = vadd.xlane.f32.xlu0 %v243
        %v245 = vpop.xlane.xlu0 %244
        %v246 = vsub.f32 %v241, %v232
        %v247 = vmul.f32 %v243, %v246
        %248 = vadd.xlane.f32.xlu0 %v247
        %v249 = vpop.xlane.xlu0 %248
        %v250 = vrcp.pop %v245
        %v251 = vmul.f32 %v250, %v249
        %v252 = vlog2.pop %v245
        %v253 = vmul.f32 %v252, 0.6931472
        %v254 = vsub.f32 %v238, %v253
        %v255 = vadd.f32 %v251, %v254
        %s256 = smul.u32 %s21, 8
        %v257 = vlaneseq
        %v258 = vshrl.u32 %v257, 7
        %v259 = vstv %s256
        %v260 = vadd.s32 %v259, %v258
        %vm261 = vcmp.lt.s32.totalorder %v260, 20
        %v262 = vsel %vm261, %v255, 0.0
        %vm263 = vcmask 7168
        %264 = vst.msk [vmem:[%s223] sm:$0xff] %vm263, %v262
        %p265 = scmp.lt.s32.totalorder %s21, 2
        %s266 = scalar_select %p265, %s21, 2
        %s267 = smul.addr %s266, 8
        %s268 = scalar_lea.vmem %s3, %s267
        // Predicated region
        $region41: #{tpu_custom_call.1} parent=31 // pred_check
          %p269 = pneg %p112
        $region42: #{tpu_custom_call.1} parent=31 // pred_check_branch
          %271 = sbr.rel (%p269) target = $region44
        $region43: #{tpu_custom_call.1} parent=31 // pred_region
          _
        $region44: #{tpu_custom_call.1} parent=31 // pred_fallthru
          _
      $region32: #{tpu_custom_call.1} parent=5 // pred_fallthru
        _
      %p272 = scmp.le.s32.totalorder 2, %s16
      // Predicated region
      $region45: #{tpu_custom_call.1} parent=5 // pred_check
        %p273 = pneg %p272
      $region46: #{tpu_custom_call.1} parent=5 // pred_check_branch
        %275 = sbr.rel (%p273) target = $region48
      $region47: #{tpu_custom_call.1} parent=5 // pred_region
        %s276 = ssub.s32 %s16, 2
        // Predicated region
        $region49: #{tpu_custom_call.1} parent=47 // pred_check
          %p277 = pneg %p118
        $region50: #{tpu_custom_call.1} parent=47 // pred_check_branch
          %279 = sbr.rel (%p277) target = $region52
        $region51: #{tpu_custom_call.1} parent=47 // pred_region
          %p280 = scmp.lt.s32.totalorder %s22, 2
          %s281 = scalar_select %p280, %s22, 2
          %s282 = smul.addr %s281, 8
          %s283 = scalar_lea.vmem %s3, %s282
        $region52: #{tpu_custom_call.1} parent=47 // pred_fallthru
          _
      $region48: #{tpu_custom_call.1} parent=5 // pred_fallthru
        _
    $region6: #{tpu_custom_call.1} parent=1 // loop_footer
      %s20 = sadd.s32 1, %s16
    $region7: #{tpu_custom_call.1} parent=1 // loop_footer_branch
      %15 = sbr.rel target = $region3
    $region8: #{tpu_custom_call.1} parent=1 // loop_exit
      _
    %284 = vsyncpa [#allocation4], 1
    %s285 = scalar_lea.sflag [#allocation4], 1
    %286 = vsyncpa %s285, 1
    %287 = vsyncpa [#allocation6], 1
    %s288 = scalar_lea.sflag [#allocation6], 1
    %289 = vsyncpa %s288, 1

</llo_original>
